<compile_context>
chip_gen: v5e
topology: v5e:2x2
jax: 0.10.0
libtpu: 0.0.40
codegen_flags: <defaults>
</compile_context>

<pallas_src>
import functools

import jax
import jax.numpy as jnp
from jax.experimental import pallas as pl
from jax.experimental.pallas import tpu as pltpu


def _cdiv(a: int, b: int) -> int:
    return -(-a // b)


def _round_up(a: int, b: int) -> int:
    return _cdiv(a, b) * b


# -----------------------------------------------------------------------------
# Kernel: MLP1 (Linear -> SiLU -> Linear) + segment-sum pooling over node tiles.
# grid = (n_split, tiles_per_split); outputs are per-split partial sums/counts.
# -----------------------------------------------------------------------------
def _mlp1_pool_kernel(x_ref, batch_ref, w1_ref, b1_ref, w2_ref, b2_ref,
                      sum_ref, cnt_ref, *, n_valid: int):
    @pl.when(pl.program_id(1) == 0)
    def _init():
        sum_ref[...] = jnp.zeros_like(sum_ref)
        cnt_ref[...] = jnp.zeros_like(cnt_ref)

    tile_n = x_ref.shape[0]
    g = sum_ref.shape[0]

    # Global row offset of this tile (unclamped: duplicated/padded tiles from a
    # clamped index_map are fully masked out below).
    tile_idx = pl.program_id(0) * pl.num_programs(1) + pl.program_id(1)
    row0 = tile_idx * tile_n
    rows = row0 + jax.lax.broadcasted_iota(jnp.int32, (tile_n, 1), 0)
    valid = rows < n_valid                                   # (tile_n, 1) bool

    # ---- MLP1: Linear -> SiLU -> Linear (bf16 MXU operands, f32 accumulation).
    x = x_ref[...].astype(jnp.bfloat16)                      # (tile_n, H)
    h = jnp.dot(x, w1_ref[...], preferred_element_type=jnp.float32) + b1_ref[...]
    h = h * jax.nn.sigmoid(h)                                # SiLU kept in f32
    h = jnp.dot(h.astype(jnp.bfloat16), w2_ref[...],
                preferred_element_type=jnp.float32) + b2_ref[...]
    h = jnp.where(valid, h, 0.0)                             # kill ragged-tail garbage

    # ---- Segment pooling as a one-hot matmul on the MXU.
    # one_hot[n, g] = (batch[n] == g) for valid rows; pooled += one_hot^T @ h.
    # TODO(synk): for very small num_graphs (<8) a VPU masked reduction would use
    # the MXU rows less wastefully; keep the matmul for general num_graphs.
    gids = jax.lax.broadcasted_iota(jnp.int32, (tile_n, g), 1)
    onehot = (gids == batch_ref[...]) & valid                # (tile_n, g) bool
    onehot_f = onehot.astype(jnp.float32)                    # exact in bf16 too
    sum_ref[...] += jax.lax.dot_general(
        onehot_f.astype(jnp.bfloat16), h.astype(jnp.bfloat16),
        dimension_numbers=(((0,), (0,)), ((), ())),
        preferred_element_type=jnp.float32)                  # (g, H)
    cnt_ref[...] += jnp.sum(onehot_f, axis=0, keepdims=True)  # (1, g) node counts


def _mlp1_pool(node_feats, batch, num_graphs, params, *,
               tile_n_max: int = 512, n_split: int = 2,
               vmem_limit_bytes: int = 32 * 1024 * 1024):
    """Returns per-split partial sums (S, G, H) and counts (S, 1, G)."""
    n, h_dim = node_feats.shape
    g = int(num_graphs)

    # tile_n: multiple of 8 (sublane), capped so double-buffered f32 tiles stay
    # small on every generation (incl. v7x's 64 MiB VMEM).
    tile_n = min(tile_n_max, _round_up(n, 8))
    n_tiles = _cdiv(n, tile_n)
    n_split = max(1, min(n_split, n_tiles))
    tiles_per_split = _cdiv(n_tiles, n_split)

    x = node_feats.astype(jnp.float32)            # stays f32 in HBM; cast in-kernel
    b = batch.astype(jnp.int32).reshape(n, 1)
    w1 = params["w1"].astype(jnp.bfloat16)
    w2 = params["w2"].astype(jnp.bfloat16)
    b1 = params["b1"].astype(jnp.float32)
    b2 = params["b2"].astype(jnp.float32)

    def node_map(s, t):
        # Clamp so over-provisioned tiles of the last split re-read the final
        # tile; the kernel masks them out via the (unclamped) global row index.
        return (jnp.minimum(s * tiles_per_split + t, n_tiles - 1), 0)

    kernel = functools.partial(_mlp1_pool_kernel, n_valid=n)

    psum, pcnt = pl.pallas_call(
        kernel,
        out_shape=(
            jax.ShapeDtypeStruct((n_split, g, h_dim), jnp.float32),
            jax.ShapeDtypeStruct((n_split, 1, g), jnp.float32),
        ),
        grid=(n_split, tiles_per_split),
        in_specs=[
            pl.BlockSpec((tile_n, h_dim), node_map),             # node tile
            pl.BlockSpec((tile_n, 1), node_map),                 # batch ids
            pl.BlockSpec((h_dim, h_dim), lambda s, t: (0, 0)),   # w1 (resident)
            pl.BlockSpec((1, h_dim), lambda s, t: (0, 0)),       # b1
            pl.BlockSpec((h_dim, h_dim), lambda s, t: (0, 0)),   # w2
            pl.BlockSpec((1, h_dim), lambda s, t: (0, 0)),       # b2
        ],
        out_specs=(
            pl.BlockSpec((None, g, h_dim), lambda s, t: (s, 0, 0)),  # partial sums
            pl.BlockSpec((None, 1, g), lambda s, t: (s, 0, 0)),      # partial counts
        ),
        compiler_params=pltpu.CompilerParams(
            dimension_semantics=("parallel", "arbitrary"),
            vmem_limit_bytes=vmem_limit_bytes,
        ),
    )(x, b, w1, b1, w2, b2)
    return psum, pcnt


# -----------------------------------------------------------------------------
# Module: parameter construction + forward
# -----------------------------------------------------------------------------
def make_mlp_params(key, c_in, c_hidden, c_out):
    # num_layers_phi = 2 -> Linear(c_in, c_hidden) -> SiLU -> Linear(c_hidden, c_out)
    # TODO(synk): generalize to arbitrary num_layers_phi / activation / dropout
    # configurations (fixed to the 2-layer SiLU eval-mode case here).
    k1, k2, k3, k4 = jax.random.split(key, 4)
    s1 = 1.0 / jnp.sqrt(c_in)
    s2 = 1.0 / jnp.sqrt(c_hidden)
    return {
        "w1": jax.random.uniform(k1, (c_in, c_hidden), jnp.float32, -s1, s1),
        "b1": jax.random.uniform(k2, (1, c_hidden), jnp.float32, -s1, s1),
        "w2": jax.random.uniform(k3, (c_hidden, c_out), jnp.float32, -s2, s2),
        "b2": jax.random.uniform(k4, (1, c_out), jnp.float32, -s2, s2),
    }


class InvariantLigandPocketPoolingHeadPallas:
    def __init__(self, c_hidden, num_tasks, pool_type, key):
        assert pool_type in ("sum", "mean")
        self.c_hidden = c_hidden
        self.pool_type = pool_type
        k1, k2 = jax.random.split(key)
        self.mlp1 = make_mlp_params(k1, c_hidden, c_hidden, c_hidden)
        self.mlp2 = make_mlp_params(k2, 2 * c_hidden, c_hidden, num_tasks)

    def __call__(self, data):
        # Concat order follows dict insertion order, exactly like the PyTorch
        # module's `for _k, v in data.items()` loop (ligand then pocket).
        items = list(data.items())
        assert len(items) == 2, "expected exactly two graph types (ligand, pocket)"
        gs = {int(v["num_graphs"]) for _, v in items}
        assert len(gs) == 1, "all graph types must share num_graphs"
        g = gs.pop()

        pooled_list = []
        for _k, v in items:
            psum, pcnt = _mlp1_pool(v["node_feats"], v["batch"], g, self.mlp1)
            pooled = jnp.sum(psum, axis=0)                    # (G, H)
            if self.pool_type == "mean":
                counts = jnp.sum(pcnt, axis=0).reshape(g, 1)  # (G, 1)
                pooled = pooled / jnp.maximum(counts, 1.0)
            pooled_list.append(pooled)

        pooled = jnp.concatenate(pooled_list, axis=-1)         # (G, 2H)
        # headMLP2 on a (G, 2H) tensor is a few-KFLOP op; per perf guidance it
        # stays in plain XLA rather than paying another pallas_call launch.
        p = self.mlp2
        h = pooled @ p["w1"] + p["b1"]
        h = h * jax.nn.sigmoid(h)
        return h @ p["w2"] + p["b2"]


# -----------------------------------------------------------------------------
# Pure-JAX (f32) reference
# -----------------------------------------------------------------------------
def _ref_forward(module, data):
    def mlp(x, p):
        h = x @ p["w1"] + p["b1"]
        h = h * jax.nn.sigmoid(h)
        return h @ p["w2"] + p["b2"]

    pooled_list = []
    for _k, v in data.items():
        h = mlp(v["node_feats"].astype(jnp.float32), module.mlp1)
        g = int(v["num_graphs"])
        idx = v["batch"].astype(jnp.int32)
        seg = jax.ops.segment_sum(h, idx, num_segments=g)
        if module.pool_type == "mean":
            counts = jax.ops.segment_sum(
                jnp.ones((h.shape[0],), jnp.float32), idx, num_segments=g)
            seg = seg / jnp.maximum(counts, 1.0)[:, None]
        pooled_list.append(seg)
    return mlp(jnp.concatenate(pooled_list, axis=-1), module.mlp2)


if __name__ == "__main__":
    c_hidden = 32
    num_tasks = 1
    num_graphs = 2
    n_ligand = 16
    n_pocket = 24

    key = jax.random.PRNGKey(0)
    k_mod, k_lig, k_poc = jax.random.split(key, 3)

    module = InvariantLigandPocketPoolingHeadPallas(
        c_hidden=c_hidden, num_tasks=num_tasks, pool_type="mean", key=k_mod
    )

    data = {
        "ligand": {
            "node_feats": jax.random.normal(k_lig, (n_ligand, c_hidden), jnp.float32),
            "batch": jnp.repeat(jnp.arange(num_graphs), n_ligand // num_graphs),
            "num_graphs": num_graphs,
        },
        "pocket": {
            "node_feats": jax.random.normal(k_poc, (n_pocket, c_hidden), jnp.float32),
            "batch": jnp.repeat(jnp.arange(num_graphs), n_pocket // num_graphs),
            "num_graphs": num_graphs,
        },
    }

    # mean pooling
    out = jax.block_until_ready(module(data))
    assert out.shape == (num_graphs, num_tasks)
    ref = jax.block_until_ready(_ref_forward(module, data))
    # bf16 MXU operands vs. f32 reference -> relaxed tolerance.
    assert jnp.allclose(out, ref, atol=2e-2, rtol=2e-2), (out, ref)

    # sum pooling (same kernel; counts output unused)
    module.pool_type = "sum"
    out_s = jax.block_until_ready(module(data))
    ref_s = jax.block_until_ready(_ref_forward(module, data))
    assert jnp.allclose(out_s, ref_s, atol=2e-2, rtol=2e-2), (out_s, ref_s)

    print("KERNEL_OK")
</pallas_src>

<mosaic_0001>
module attributes {stable_mosaic.version = 11 : i64} {
  func.func @_mlp1_pool_kernel(%arg0: i32, %arg1: i32, %arg2: memref<16x32xf32, #tpu.memory_space<vmem>>, %arg3: memref<16x1xi32, #tpu.memory_space<vmem>>, %arg4: memref<32x32xbf16, #tpu.memory_space<vmem>>, %arg5: memref<1x32xf32, #tpu.memory_space<vmem>>, %arg6: memref<32x32xbf16, #tpu.memory_space<vmem>>, %arg7: memref<1x32xf32, #tpu.memory_space<vmem>>, %arg8: memref<1x2x32xf32, #tpu.memory_space<vmem>>, %arg9: memref<1x1x2xf32, #tpu.memory_space<vmem>>) attributes {dimension_semantics = [#tpu.dimension_semantics<parallel>, #tpu.dimension_semantics<arbitrary>], iteration_bounds = array<i64: 1, 1>, scalar_prefetch = 0 : i64, scratch_operands = 0 : i64, tpu.core_type = #tpu.core_type<tc>, window_params = [{transform_indices = @transform_0, window_bounds = array<i64: 16, 32>}, {transform_indices = @transform_1, window_bounds = array<i64: 16, 1>}, {pipeline_mode = #tpu.pipeline_mode<synchronous>, transform_indices = @transform_2, window_bounds = array<i64: 32, 32>}, {pipeline_mode = #tpu.pipeline_mode<synchronous>, transform_indices = @transform_3, window_bounds = array<i64: 1, 32>}, {pipeline_mode = #tpu.pipeline_mode<synchronous>, transform_indices = @transform_4, window_bounds = array<i64: 32, 32>}, {pipeline_mode = #tpu.pipeline_mode<synchronous>, transform_indices = @transform_5, window_bounds = array<i64: 1, 32>}, {transform_indices = @transform_6, window_bounds = array<i64: 1, 2, 32>}, {transform_indices = @transform_7, window_bounds = array<i64: 1, 1, 2>}]} {
    %c0_i32 = arith.constant 0 : i32
    %0 = arith.cmpi eq, %arg1, %c0_i32 : i32
    %1 = arith.extui %0 : i1 to i32
    %c0_i32_0 = arith.constant 0 : i32
    %2 = arith.cmpi ne, %1, %c0_i32_0 : i32
    scf.if %2 {
      %cst_30 = arith.constant 0.000000e+00 : f32
      %59 = vector.broadcast %cst_30 : f32 to vector<2x32xf32>
      %c0_31 = arith.constant 0 : index
      %c0_32 = arith.constant 0 : index
      %c0_33 = arith.constant 0 : index
      %60 = vector.load %arg8[%c0_31, %c0_32, %c0_33] : memref<1x2x32xf32, #tpu.memory_space<vmem>>, vector<1x2x32xf32>
      %61 = vector.shape_cast %60 : vector<1x2x32xf32> to vector<2x32xf32>
      %62 = vector.shape_cast %59 : vector<2x32xf32> to vector<1x2x32xf32>
      tpu.vector_store %arg8[%c0_31, %c0_32, %c0_33], %62 {strides = array<i32>} : memref<1x2x32xf32, #tpu.memory_space<vmem>>, vector<1x2x32xf32>,
      %cst_34 = arith.constant 0.000000e+00 : f32
      %63 = vector.broadcast %cst_34 : f32 to vector<1x2xf32>
      %c0_35 = arith.constant 0 : index
      %c0_36 = arith.constant 0 : index
      %c0_37 = arith.constant 0 : index
      %64 = vector.load %arg9[%c0_35, %c0_36, %c0_37] : memref<1x1x2xf32, #tpu.memory_space<vmem>>, vector<1x1x2xf32>
      %65 = vector.shape_cast %64 : vector<1x1x2xf32> to vector<1x2xf32>
      %66 = vector.shape_cast %63 : vector<1x2xf32> to vector<1x1x2xf32>
      tpu.vector_store %arg9[%c0_35, %c0_36, %c0_37], %66 {strides = array<i32>} : memref<1x1x2xf32, #tpu.memory_space<vmem>>, vector<1x1x2xf32>,
    } else {
    }
    %c1_i32 = arith.constant 1 : i32
    %3 = arith.muli %arg0, %c1_i32 : i32
    %4 = arith.addi %3, %arg1 : i32
    %c16_i32 = arith.constant 16 : i32
    %5 = arith.muli %4, %c16_i32 : i32
    %6 = tpu.iota {dimensions = array<i32: 0>} : vector<16x1xi32>
    %7 = vector.broadcast %5 : i32 to vector<16x1xi32>
    %8 = arith.addi %7, %6 : vector<16x1xi32>
    %c16_i32_1 = arith.constant 16 : i32
    %9 = vector.broadcast %c16_i32_1 : i32 to vector<16x1xi32>
    %10 = arith.cmpi slt, %8, %9 : vector<16x1xi32>
    %c0 = arith.constant 0 : index
    %c0_2 = arith.constant 0 : index
    %11 = vector.load %arg2[%c0, %c0_2] : memref<16x32xf32, #tpu.memory_space<vmem>>, vector<16x32xf32>
    %12 = arith.truncf %11 : vector<16x32xf32> to vector<16x32xbf16>
    %c0_3 = arith.constant 0 : index
    %c0_4 = arith.constant 0 : index
    %13 = vector.load %arg4[%c0_3, %c0_4] : memref<32x32xbf16, #tpu.memory_space<vmem>>, vector<32x32xbf16>
    %cst = arith.constant dense<0.000000e+00> : vector<16x32xf32>
    %14 = tpu.matmul %12, %13, %cst {dimension_numbers = #tpu.dot_dimension_numbers<[1], [0], [0], [1], [0, 0, 1, 1], [], []>} : vector<16x32xbf16>, vector<32x32xbf16>, vector<16x32xf32> -> vector<16x32xf32>
    %c0_5 = arith.constant 0 : index
    %c0_6 = arith.constant 0 : index
    %15 = vector.load %arg5[%c0_5, %c0_6] : memref<1x32xf32, #tpu.memory_space<vmem>>, vector<1x32xf32>
    %16 = vector.broadcast %15 : vector<1x32xf32> to vector<16x32xf32>
    %17 = arith.addf %14, %16 : vector<16x32xf32>
    %18 = arith.negf %17 : vector<16x32xf32>
    %19 = math.exp %18 : vector<16x32xf32>
    %cst_7 = arith.constant 1.000000e+00 : f32
    %20 = vector.broadcast %cst_7 : f32 to vector<16x32xf32>
    %21 = arith.addf %20, %19 : vector<16x32xf32>
    %22 = arith.divf %20, %21 : vector<16x32xf32>
    %23 = arith.mulf %17, %22 : vector<16x32xf32>
    %24 = arith.truncf %23 : vector<16x32xf32> to vector<16x32xbf16>
    %c0_8 = arith.constant 0 : index
    %c0_9 = arith.constant 0 : index
    %25 = vector.load %arg6[%c0_8, %c0_9] : memref<32x32xbf16, #tpu.memory_space<vmem>>, vector<32x32xbf16>
    %cst_10 = arith.constant dense<0.000000e+00> : vector<16x32xf32>
    %26 = tpu.matmul %24, %25, %cst_10 {dimension_numbers = #tpu.dot_dimension_numbers<[1], [0], [0], [1], [0, 0, 1, 1], [], []>} : vector<16x32xbf16>, vector<32x32xbf16>, vector<16x32xf32> -> vector<16x32xf32>
    %c0_11 = arith.constant 0 : index
    %c0_12 = arith.constant 0 : index
    %27 = vector.load %arg7[%c0_11, %c0_12] : memref<1x32xf32, #tpu.memory_space<vmem>>, vector<1x32xf32>
    %28 = vector.broadcast %27 : vector<1x32xf32> to vector<16x32xf32>
    %29 = arith.addf %26, %28 : vector<16x32xf32>
    %cst_13 = arith.constant 0.000000e+00 : f32
    %30 = vector.shape_cast %10 : vector<16x1xi1> to vector<16x1xi1>
    %31 = vector.broadcast %30 : vector<16x1xi1> to vector<16x32xi1>
    %32 = vector.broadcast %cst_13 : f32 to vector<16x32xf32>
    %33 = arith.select %31, %29, %32 : vector<16x32xi1>, vector<16x32xf32>
    %34 = tpu.iota {dimensions = array<i32: 1>} : vector<16x2xi32>
    %c0_14 = arith.constant 0 : index
    %c0_15 = arith.constant 0 : index
    %35 = vector.load %arg3[%c0_14, %c0_15] : memref<16x1xi32, #tpu.memory_space<vmem>>, vector<16x1xi32>
    %36 = vector.broadcast %35 : vector<16x1xi32> to vector<16x2xi32>
    %37 = arith.cmpi eq, %34, %36 : vector<16x2xi32>
    %38 = vector.broadcast %10 : vector<16x1xi1> to vector<16x2xi1>
    %39 = arith.andi %37, %38 : vector<16x2xi1>
    %40 = arith.extui %39 : vector<16x2xi1> to vector<16x2xi32>
    %41 = arith.sitofp %40 : vector<16x2xi32> to vector<16x2xf32>
    %c0_16 = arith.constant 0 : index
    %c0_17 = arith.constant 0 : index
    %c0_18 = arith.constant 0 : index
    %42 = vector.load %arg8[%c0_16, %c0_17, %c0_18] : memref<1x2x32xf32, #tpu.memory_space<vmem>>, vector<1x2x32xf32>
    %43 = vector.shape_cast %42 : vector<1x2x32xf32> to vector<2x32xf32>
    %44 = arith.truncf %41 : vector<16x2xf32> to vector<16x2xbf16>
    %45 = arith.truncf %33 : vector<16x32xf32> to vector<16x32xbf16>
    %cst_19 = arith.constant dense<0.000000e+00> : vector<2x32xf32>
    %46 = tpu.matmul %44, %45, %cst_19 {dimension_numbers = #tpu.dot_dimension_numbers<[0], [0], [1], [1], [0, 1, 1, 1], [], []>} : vector<16x2xbf16>, vector<16x32xbf16>, vector<2x32xf32> -> vector<2x32xf32>
    %47 = arith.addf %43, %46 : vector<2x32xf32>
    %c0_20 = arith.constant 0 : index
    %c0_21 = arith.constant 0 : index
    %c0_22 = arith.constant 0 : index
    %48 = vector.load %arg8[%c0_20, %c0_21, %c0_22] : memref<1x2x32xf32, #tpu.memory_space<vmem>>, vector<1x2x32xf32>
    %49 = vector.shape_cast %48 : vector<1x2x32xf32> to vector<2x32xf32>
    %50 = vector.shape_cast %47 : vector<2x32xf32> to vector<1x2x32xf32>
    tpu.vector_store %arg8[%c0_20, %c0_21, %c0_22], %50 {strides = array<i32>} : memref<1x2x32xf32, #tpu.memory_space<vmem>>, vector<1x2x32xf32>,
    %c0_23 = arith.constant 0 : index
    %c0_24 = arith.constant 0 : index
    %c0_25 = arith.constant 0 : index
    %51 = vector.load %arg9[%c0_23, %c0_24, %c0_25] : memref<1x1x2xf32, #tpu.memory_space<vmem>>, vector<1x1x2xf32>
    %52 = vector.shape_cast %51 : vector<1x1x2xf32> to vector<1x2xf32>
    %cst_26 = arith.constant dense<0.000000e+00> : vector<2xf32>
    %53 = vector.multi_reduction <add>, %41, %cst_26 [0] : vector<16x2xf32> to vector<2xf32>
    %54 = vector.shape_cast %53 : vector<2xf32> to vector<1x2xf32>
    %55 = arith.addf %52, %54 : vector<1x2xf32>
    %c0_27 = arith.constant 0 : index
    %c0_28 = arith.constant 0 : index
    %c0_29 = arith.constant 0 : index
    %56 = vector.load %arg9[%c0_27, %c0_28, %c0_29] : memref<1x1x2xf32, #tpu.memory_space<vmem>>, vector<1x1x2xf32>
    %57 = vector.shape_cast %56 : vector<1x1x2xf32> to vector<1x2xf32>
    %58 = vector.shape_cast %55 : vector<1x2xf32> to vector<1x1x2xf32>
    tpu.vector_store %arg9[%c0_27, %c0_28, %c0_29], %58 {strides = array<i32>} : memref<1x1x2xf32, #tpu.memory_space<vmem>>, vector<1x1x2xf32>,
    return
  }
  func.func @transform_0(%arg0: i32, %arg1: i32) -> (i32, i32) {
    %c1_i32 = arith.constant 1 : i32
    %0 = arith.muli %arg0, %c1_i32 : i32
    %1 = arith.addi %0, %arg1 : i32
    %c0_i32 = arith.constant 0 : i32
    %2 = arith.minsi %1, %c0_i32 : i32
    %c0_i32_0 = arith.constant 0 : i32
    %c0_i32_1 = arith.constant 0 : i32
    return %2, %c0_i32_0 : i32, i32
  }
  func.func @transform_1(%arg0: i32, %arg1: i32) -> (i32, i32) {
    %c1_i32 = arith.constant 1 : i32
    %0 = arith.muli %arg0, %c1_i32 : i32
    %1 = arith.addi %0, %arg1 : i32
    %c0_i32 = arith.constant 0 : i32
    %2 = arith.minsi %1, %c0_i32 : i32
    %c0_i32_0 = arith.constant 0 : i32
    %c0_i32_1 = arith.constant 0 : i32
    return %2, %c0_i32_0 : i32, i32
  }
  func.func @transform_2(%arg0: i32, %arg1: i32) -> (i32, i32) {
    %c0_i32 = arith.constant 0 : i32
    %c0_i32_0 = arith.constant 0 : i32
    %c0_i32_1 = arith.constant 0 : i32
    return %c0_i32, %c0_i32_0 : i32, i32
  }
  func.func @transform_3(%arg0: i32, %arg1: i32) -> (i32, i32) {
    %c0_i32 = arith.constant 0 : i32
    %c0_i32_0 = arith.constant 0 : i32
    %c0_i32_1 = arith.constant 0 : i32
    return %c0_i32, %c0_i32_0 : i32, i32
  }
  func.func @transform_4(%arg0: i32, %arg1: i32) -> (i32, i32) {
    %c0_i32 = arith.constant 0 : i32
    %c0_i32_0 = arith.constant 0 : i32
    %c0_i32_1 = arith.constant 0 : i32
    return %c0_i32, %c0_i32_0 : i32, i32
  }
  func.func @transform_5(%arg0: i32, %arg1: i32) -> (i32, i32) {
    %c0_i32 = arith.constant 0 : i32
    %c0_i32_0 = arith.constant 0 : i32
    %c0_i32_1 = arith.constant 0 : i32
    return %c0_i32, %c0_i32_0 : i32, i32
  }
  func.func @transform_6(%arg0: i32, %arg1: i32) -> (i32, i32, i32) {
    %c0_i32 = arith.constant 0 : i32
    %c0_i32_0 = arith.constant 0 : i32
    %c0_i32_1 = arith.constant 0 : i32
    return %arg0, %c0_i32, %c0_i32_0 : i32, i32, i32
  }
  func.func @transform_7(%arg0: i32, %arg1: i32) -> (i32, i32, i32) {
    %c0_i32 = arith.constant 0 : i32
    %c0_i32_0 = arith.constant 0 : i32
    %c0_i32_1 = arith.constant 0 : i32
    return %arg0, %c0_i32, %c0_i32_0 : i32, i32, i32
  }
}

</mosaic_0001>

<llo_original>
// kernel: tpu_custom_call.1
$region0: #{tpu_custom_call.1}
  #allocation0 [shape = 'u32[]', space=smem, size = 0x4, offset = 0x4, fixed_abs, tag = 'smem constant byte address 0x4 - core index']
  #allocation1 [shape = 'u32[72,128]{1,0:T(1,128)}', space=vmem, size = 0x9000, scoped, tag = 'internal scratch']
  %s0 = inlined_call_operand.vmem [shape: f32[16,32], index: 0, kind: input, shape index: {}]
  %s1 = inlined_call_operand.vmem [shape: s32[16,1], index: 1, kind: input, shape index: {}]
  %s2 = inlined_call_operand.hbm [shape: bf16[32,32], index: 2, kind: input, shape index: {}]
  %s3 = inlined_call_operand.vmem [shape: f32[1,32], index: 3, kind: input, shape index: {}]
  %s4 = inlined_call_operand.hbm [shape: bf16[32,32], index: 4, kind: input, shape index: {}]
  %s5 = inlined_call_operand.vmem [shape: f32[1,32], index: 5, kind: input, shape index: {}]
  %s6 = inlined_call_operand.hbm [shape: f32[1,2,32], index: 6, kind: output, shape index: {0}]
  %s7 = inlined_call_operand.hbm [shape: f32[1,1,2], index: 7, kind: output, shape index: {1}]
  %8 = xla_tuple %s6, %s7
  %s9 = sld [smem:[#allocation0]]
  $region54: #{tpu_custom_call.1} parent=0
    _
  %s11 = ssub.s32 1, %s9
  %s12 = scalar_select 0, %s11, %s9
  $region1: #{tpu_custom_call.1} parent=0
    #allocation2 [shape = 'u8[8192]{0}', space=vmem, size = 0x2000, scoped, tag = 'input window, operand 2, single buffered']
    #allocation3 [shape = 's32[1]{0}', space=sflag, size = 0x4, scoped, tag = 'scoped memory for tpu_custom_call.1']
    #allocation4 [shape = 's32[1]{0}', space=sflag, size = 0x4, scoped, tag = 'scoped memory for tpu_custom_call.1']
    #allocation5 [shape = 'u8[8192]{0}', space=vmem, size = 0x2000, scoped, tag = 'input window, operand 4, single buffered']
    #allocation6 [shape = 's32[1]{0}', space=sflag, size = 0x4, scoped, tag = 'scoped memory for tpu_custom_call.1']
    #allocation7 [shape = 'u8[1024]{0}', space=vmem, size = 0x400, scoped, tag = 'output window, operand 0, single buffered']
    #allocation8 [shape = 'u8[512]{0}', space=vmem, size = 0x400, scoped, tag = 'output window, operand 1, single buffered']
    #allocation9 [shape = 's32[1]{0}', space=sflag, size = 0x4, scoped, tag = 'scoped memory for tpu_custom_call.1']
    %13 = vsyncpa [#allocation3], 0
    %14 = vsyncpa [#allocation6], 0
    %15 = vsyncpa [#allocation4], 0
    %16 = vsyncpa [#allocation9], 0
    // Predicated region
    $region2: #{tpu_custom_call.1} parent=1 // pred_check
      _
    $region3: #{tpu_custom_call.1} parent=1 // pred_check_branch
      %18 = sbr.rel (0) target = $region5
    $region4: #{tpu_custom_call.1} parent=1 // pred_region
      %s19 = sadd.s32 0, 0
      %p20 = scmp.lt.s32.totalorder %s19, 0
      %s21 = scalar_select %p20, %s19, 0
      %s22 = smul.u32 2, %s21
      %p23 = scmp.lt.s32.totalorder %s22, 1
      %s24 = scalar_select %p23, %s22, 1
      %s25 = smul.addr %s24, 8
      %s26 = scalar_lea.vmem %s0, %s25
      %s27 = sadd.s32 0, 0
      %p28 = scmp.lt.s32.totalorder %s27, 0
      %s29 = scalar_select %p28, %s27, 0
      %s30 = smul.u32 2, %s29
    $region5: #{tpu_custom_call.1} parent=1 // pred_fallthru
      _
    // Predicated region
    $region6: #{tpu_custom_call.1} parent=1 // pred_check
      _
    $region7: #{tpu_custom_call.1} parent=1 // pred_check_branch
      %32 = sbr.rel (0) target = $region9
    $region8: #{tpu_custom_call.1} parent=1 // pred_region
      %s33 = sadd.s32 0, 0
      %p34 = scmp.lt.s32.totalorder %s33, 0
      %s35 = scalar_select %p34, %s33, 0
      %s36 = smul.u32 2, %s35
      %p37 = scmp.lt.s32.totalorder %s36, 1
      %s38 = scalar_select %p37, %s36, 1
      %s39 = smul.addr %s38, 8
      %s40 = scalar_lea.vmem %s1, %s39
      %s41 = sadd.s32 0, 0
      %p42 = scmp.lt.s32.totalorder %s41, 0
      %s43 = scalar_select %p42, %s41, 0
      %s44 = smul.u32 2, %s43
    $region9: #{tpu_custom_call.1} parent=1 // pred_fallthru
      _
    // Predicated region
    $region10: #{tpu_custom_call.1} parent=1 // pred_check
      _
    $region11: #{tpu_custom_call.1} parent=1 // pred_check_branch
      %46 = sbr.rel (0) target = $region13
    $region12: #{tpu_custom_call.1} parent=1 // pred_region
      %48 = vsyncadd [#allocation3], 0
      %s49 = sshll.u32 %s2, 4
      %s50 = int_to_ptr.hbm [resolvable:$true] %s49
      %s51 = sshll.u32 [#allocation2], 4
      %s52 = int_to_ptr.vmem [resolvable:$true] %s51
      %57 = dma.hbm_to_vmem [thread:$0]  %s50, 256, %s52, [#allocation3], 64, 64, 4
    $region13: #{tpu_custom_call.1} parent=1 // pred_fallthru
      _
    // Predicated region
    $region14: #{tpu_custom_call.1} parent=1 // pred_check
      _
    $region15: #{tpu_custom_call.1} parent=1 // pred_check_branch
      %59 = sbr.rel (0) target = $region17
    $region16: #{tpu_custom_call.1} parent=1 // pred_region
      _
    $region17: #{tpu_custom_call.1} parent=1 // pred_fallthru
      _
    // Predicated region
    $region18: #{tpu_custom_call.1} parent=1 // pred_check
      _
    $region19: #{tpu_custom_call.1} parent=1 // pred_check_branch
      %61 = sbr.rel (0) target = $region21
    $region20: #{tpu_custom_call.1} parent=1 // pred_region
      %63 = vsyncadd [#allocation6], 0
      %s64 = sshll.u32 %s4, 4
      %s65 = int_to_ptr.hbm [resolvable:$true] %s64
      %s66 = sshll.u32 [#allocation5], 4
      %s67 = int_to_ptr.vmem [resolvable:$true] %s66
      %72 = dma.hbm_to_vmem [thread:$0]  %s65, 256, %s67, [#allocation6], 64, 64, 4
    $region21: #{tpu_custom_call.1} parent=1 // pred_fallthru
      _
    // Predicated region
    $region22: #{tpu_custom_call.1} parent=1 // pred_check
      _
    $region23: #{tpu_custom_call.1} parent=1 // pred_check_branch
      %74 = sbr.rel (0) target = $region25
    $region24: #{tpu_custom_call.1} parent=1 // pred_region
      _
    $region25: #{tpu_custom_call.1} parent=1 // pred_fallthru
      _
    // Predicated region
    $region26: #{tpu_custom_call.1} parent=1 // pred_check
      _
    $region27: #{tpu_custom_call.1} parent=1 // pred_check_branch
      %76 = sbr.rel (0) target = $region29
    $region28: #{tpu_custom_call.1} parent=1 // pred_region
      %78 = dma.done [#allocation3], 256
    $region29: #{tpu_custom_call.1} parent=1 // pred_fallthru
      _
    // Predicated region
    $region30: #{tpu_custom_call.1} parent=1 // pred_check
      _
    $region31: #{tpu_custom_call.1} parent=1 // pred_check_branch
      %80 = sbr.rel (0) target = $region33
    $region32: #{tpu_custom_call.1} parent=1 // pred_region
      %82 = dma.done [#allocation6], 256
    $region33: #{tpu_custom_call.1} parent=1 // pred_fallthru
      _
    %s83 = sadd.s32 0, 0
    %p84 = scmp.lt.s32.totalorder %s83, 0
    %s85 = scalar_select %p84, %s83, 0
    %s86 = smul.u32 2, %s85
    %p87 = scmp.lt.s32.totalorder %s86, 1
    %s88 = scalar_select %p87, %s86, 1
    %s89 = smul.addr %s88, 8
    %s90 = scalar_lea.vmem %s0, %s89
    %s91 = sadd.s32 0, 0
    %p92 = scmp.lt.s32.totalorder %s91, 0
    %s93 = scalar_select %p92, %s91, 0
    %s94 = smul.u32 2, %s93
    %p95 = scmp.lt.s32.totalorder %s94, 1
    %s96 = scalar_select %p95, %s94, 1
    %s97 = smul.addr %s96, 8
    %s98 = scalar_lea.vmem %s1, %s97
    %s99 = sadd.s32 0, 0
    %p100 = scmp.lt.s32.totalorder %s99, 0
    %s101 = scalar_select %p100, %s99, 0
    %s102 = smul.u32 2, %s101
    %p103 = scmp.lt.s32.totalorder %s102, 1
    %s104 = scalar_select %p103, %s102, 1
    %s105 = smul.addr %s104, 8
    %s106 = scalar_lea.vmem %s0, %s105
    %s107 = sadd.s32 0, 0
    %p108 = scmp.lt.s32.totalorder %s107, 0
    %s109 = scalar_select %p108, %s107, 0
    %s110 = smul.u32 2, %s109
    %s111 = sadd.s32 0, 0
    %p112 = scmp.lt.s32.totalorder %s111, 0
    %s113 = scalar_select %p112, %s111, 0
    %s114 = smul.u32 2, %s113
    %p115 = scmp.lt.s32.totalorder %s114, 1
    %s116 = scalar_select %p115, %s114, 1
    %s117 = smul.addr %s116, 8
    %s118 = scalar_lea.vmem %s1, %s117
    %s119 = sadd.s32 0, 0
    %p120 = scmp.lt.s32.totalorder %s119, 0
    %s121 = scalar_select %p120, %s119, 0
    %s122 = smul.u32 2, %s121
    %p124 = scmp.eq.s32.totalorder 0, 0
    // Predicated region
    $region34: #{tpu_custom_call.1} parent=1 // pred_check
      %p125 = pneg %p124
    $region35: #{tpu_custom_call.1} parent=1 // pred_check_branch
      %127 = sbr.rel (%p125) target = $region37
    $region36: #{tpu_custom_call.1} parent=1 // pred_region
      %vm128 = vcmask 254976
      %129 = vst.msk [vmem:[#allocation7] sm:$0x3] %vm128, 0.0
      %vm130 = vcmask 8192
      %131 = vst.msk [vmem:[#allocation8] sm:$0x1] %vm130, 0.0
    $region37: #{tpu_custom_call.1} parent=1 // pred_fallthru
      _
    %s132 = sadd.s32 0, 0
    %s133 = smul.u32 %s132, 16
    %v134 = vlaneseq
    %v135 = vshrl.u32 %v134, 7
    %v136 = vadd.s32 %v135, 8
    %v137 = vstv %s133
    %v138 = vadd.s32 %v137, %v135
    %v139 = vadd.s32 %v137, %v136
    %vm140 = vcmp.lt.s32.totalorder %v138, 16
    %vm141 = vcmp.lt.s32.totalorder %v139, 16
    %v142 = vld [vmem:[%s106] sm:$0xff]
    %v143 = vld [vmem:[%s106 + $0x8] sm:$0xff]
    %v144 = vpack.c.bf16 %v143, %v142
    %v145 = vld [vmem:[#allocation2] sm:$0xf]
    %v146 = vld [vmem:[#allocation2 + $0x4] sm:$0xf]
    %v147 = vld [vmem:[#allocation2 + $0x8] sm:$0xf]
    %v148 = vld [vmem:[#allocation2 + $0xc] sm:$0xf]
    %v149 = vld [vmem:[%s3] sm:$0x1]
    %v151 = vperm.slane %v149, 0
    %v157 = vunpack.c.l.b16 %v145
    %v158 = vunpack.c.l.b16 %v146
    %v159 = vunpack.c.l.b16 %v147
    %v160 = vunpack.c.l.b16 %v148
    %v161 = vpack.c.b16 %v158, %v157
    %v162 = vpack.c.b16 %v160, %v159
    %vm165 = vcmask 261120
    %v167 = vsel %vm165, %v144, 0
    %169 = vmatpush.bf16.msra.mxu0 0
    %170 = vmatpush.bf16.msra.mxu0 0
    %171 = vmatpush.bf16.msra.mxu0 0
    %172 = vmatpush.bf16.msra.mxu0 0
    %173 = vmatpush.bf16.msra.mxu0 0
    %174 = vmatpush.bf16.msra.mxu0 0
    %175 = vmatpush.bf16.msra.mxu0 %v162
    %176 = vmatpush.bf16.msra.mxu0 %v161
    %177 = vmatmul.bf16.gmra.mxu0 %v167
    %v178 = vpop.f32.mrf.mxu0
    %v179 = vadd.f32 %v151, %v178
    %v180 = vpop.f32.mrf.mxu0
    %v181 = vadd.f32 %v151, %v180
    %182 = vdwg.mxu0
    %v183 = vxor.u32 %v179, 2147483648
    %v184 = vxor.u32 %v181, 2147483648
    %v185 = vmul.f32 %v183, 1.442695
    %v186 = vpow.pop %v185
    %v187 = vmul.f32 %v184, 1.442695
    %v188 = vpow.pop %v187
    %v189 = vadd.f32 %v186, 1.0
    %v190 = vadd.f32 %v188, 1.0
    %v191 = vrcp.pop %v189
    %v192 = vmul.f32 %v189, %v191
    %v193 = vsub.f32 1.0, %v192
    %v194 = vmul.f32 %v191, %v193
    %v195 = vadd.f32 %v191, %v194
    %vm196 = vweird.f32 %v189
    %vm197 = vweird.f32 %v191
    %vm198 = vmor %vm196, %vm197
    %v199 = vsel %vm198, %v191, %v195
    %v200 = vand.u32 2147483647, %v189
    %vm201 = vcmp.eq.f32.partialorder %v200, 8.507059e+37
    %v202 = vand.u32 %v189, 2147483648
    %v203 = vor.u32 1.1754944e-38, %v202
    %v204 = vsel %vm201, %v203, %v199
    %v205 = vmul.f32 1.0, %v204
    %v206 = vrcp.pop %v190
    %v207 = vmul.f32 %v190, %v206
    %v208 = vsub.f32 1.0, %v207
    %v209 = vmul.f32 %v206, %v208
    %v210 = vadd.f32 %v206, %v209
    %vm211 = vweird.f32 %v190
    %vm212 = vweird.f32 %v206
    %vm213 = vmor %vm211, %vm212
    %v214 = vsel %vm213, %v206, %v210
    %v215 = vand.u32 2147483647, %v190
    %vm216 = vcmp.eq.f32.partialorder %v215, 8.507059e+37
    %v217 = vand.u32 %v190, 2147483648
    %v218 = vor.u32 1.1754944e-38, %v217
    %v219 = vsel %vm216, %v218, %v214
    %v220 = vmul.f32 1.0, %v219
    %v221 = vmul.f32 %v179, %v205
    %v222 = vmul.f32 %v181, %v220
    %v223 = vpack.c.bf16 %v222, %v221
    %v224 = vld [vmem:[#allocation5] sm:$0xf]
    %v225 = vld [vmem:[#allocation5 + $0x4] sm:$0xf]
    %v226 = vld [vmem:[#allocation5 + $0x8] sm:$0xf]
    %v227 = vld [vmem:[#allocation5 + $0xc] sm:$0xf]
    %v228 = vld [vmem:[%s5] sm:$0x1]
    %v230 = vperm.slane %v228, 0
    %v236 = vunpack.c.l.b16 %v224
    %v237 = vunpack.c.l.b16 %v225
    %v238 = vunpack.c.l.b16 %v226
    %v239 = vunpack.c.l.b16 %v227
    %v240 = vpack.c.b16 %v237, %v236
    %v241 = vpack.c.b16 %v239, %v238
    %v245 = vsel %vm165, %v223, 0
    %247 = vmatpush.bf16.msra.mxu0 0
    %248 = vmatpush.bf16.msra.mxu0 0
    %249 = vmatpush.bf16.msra.mxu0 0
    %250 = vmatpush.bf16.msra.mxu0 0
    %251 = vmatpush.bf16.msra.mxu0 0
    %252 = vmatpush.bf16.msra.mxu0 0
    %253 = vmatpush.bf16.msra.mxu0 %v241
    %254 = vmatpush.bf16.msra.mxu0 %v240
    %255 = vmatmul.bf16.gmra.mxu0 %v245
    %v256 = vpop.f32.mrf.mxu0
    %v257 = vadd.f32 %v230, %v256
    %v258 = vpop.f32.mrf.mxu0
    %v259 = vadd.f32 %v230, %v258
    %260 = vdwg.mxu0
    %v261 = vsel %vm140, 1, 0
    %v262 = vsel %vm141, 1, 0
    %vm263 = vcmp.eq.s32.totalorder %v261, 1
    %vm264 = vcmp.eq.s32.totalorder %v262, 1
    %v265 = vsel %vm263, %v257, 0.0
    %v266 = vsel %vm264, %v259, 0.0
    %v267 = vlaneseq
    %v268 = vand.u32 %v267, 127
    %v269 = vld [vmem:[%s118] sm:$0xff]
    %v270 = vld [vmem:[%s118 + $0x8] sm:$0xff]
    %271 = vset.pattern.permute.xlu0 0
    %272 = vperm.xlu0 %271, %v269
    %v273 = vpop.permute.xlu0 %272
    %274 = vset.pattern.permute.xlu0 0
    %275 = vperm.xlu0 %274, %v270
    %v276 = vpop.permute.xlu0 %275
    %vm277 = vcmp.eq.s32.totalorder %v268, %v273
    %vm278 = vcmp.eq.s32.totalorder %v268, %v276
    %vm279 = vmand %vm277, %vm263
    %vm280 = vmand %vm278, %vm264
    %v281 = vsel %vm279, 1, 0
    %v282 = vsel %vm280, 1, 0
    %v283 = vcvt.s32.f32 %v281
    %v284 = vcvt.s32.f32 %v282
    %v285 = vld [vmem:[#allocation7] sm:$0x3]
    %v286 = vpack.c.bf16 %v284, %v283
    %v287 = vpack.c.bf16 %v266, %v265
    %288 = vxpose.xlu0.c.b16.start [1/8] %v286, 128
    %289 = vxpose.xlu0.c.b16.cont [2/8] 0, 128
    %290 = vxpose.xlu0.c.b16.cont [3/8] 0, 128
    %291 = vxpose.xlu0.c.b16.cont [4/8] 0, 128
    %292 = vxpose.xlu0.c.b16.cont [5/8] 0, 128
    %293 = vxpose.xlu0.c.b16.cont [6/8] 0, 128
    %294 = vxpose.xlu0.c.b16.cont [7/8] 0, 128
    %295 = vxpose.xlu0.c.b16.end [8/8] 0, 128
    %v296 = vpop.trf.xlu0
    %v297 = vpop.trf.xlu0
    %v298 = vpop.trf.xlu0
    %v299 = vpop.trf.xlu0
    %v300 = vpop.trf.xlu0
    %v301 = vpop.trf.xlu0
    %v302 = vpop.trf.xlu0
    %v303 = vpop.trf.xlu0
    %vm304 = vcmask 130048
    %v306 = vsel %vm304, %v296, 0
    %308 = vmatpush.bf16.msra.mxu0 0
    %309 = vmatpush.bf16.msra.mxu0 0
    %310 = vmatpush.bf16.msra.mxu0 0
    %311 = vmatpush.bf16.msra.mxu0 0
    %312 = vmatpush.bf16.msra.mxu0 0
    %313 = vmatpush.bf16.msra.mxu0 0
    %314 = vmatpush.bf16.msra.mxu0 0
    %315 = vmatpush.bf16.msra.mxu0 %v287
    %316 = vmatmul.bf16.gmra.mxu0 %v306
    %v317 = vpop.f32.mrf.mxu0
    %v318 = vadd.f32 0.0, %v317
    %v319 = vpop.f32.mrf.mxu0
    %320 = vdwg.mxu0
    %v321 = vadd.f32 %v285, %v318
    %vm322 = vcmask 254976
    %323 = vst.msk [vmem:[#allocation7] sm:$0x3] %vm322, %v321
    %v324 = vld [vmem:[#allocation8] sm:$0x1]
    %vm325 = vcmask 15360
    %v326 = vsel %vm325, %v283, 0.0
    %v327 = vsel %vm325, %v284, 0.0
    %v328 = vadd.f32 %v326, %v327
    %v329 = vrot.slane %v328, 4
    %v330 = vadd.f32 %v328, %v329
    %v331 = vrot.slane %v330, 2
    %v332 = vadd.f32 %v330, %v331
    %v333 = vrot.slane %v332, 1
    %v334 = vadd.f32 %v332, %v333
    %v335 = vadd.f32 %v324, %v334
    %vm336 = vcmask 8192
    %337 = vst.msk [vmem:[#allocation8] sm:$0x1] %vm336, %v335
    // Predicated region
    $region38: #{tpu_custom_call.1} parent=1 // pred_check
      _
    $region39: #{tpu_custom_call.1} parent=1 // pred_check_branch
      %339 = sbr.rel (0) target = $region41
    $region40: #{tpu_custom_call.1} parent=1 // pred_region
      %341 = vsyncadd [#allocation4], 0
      %s343 = sshll.u32 [#allocation7], 4
      %s344 = int_to_ptr.vmem [resolvable:$true] %s343
      %s345 = sshll.u32 %s6, 4
      %s346 = int_to_ptr.hbm [resolvable:$true] %s345
      %348 = dma.vmem_to_hbm [thread:$0]  %s344, 32, %s346, [#allocation4]
    $region41: #{tpu_custom_call.1} parent=1 // pred_fallthru
      _
    // Predicated region
    $region42: #{tpu_custom_call.1} parent=1 // pred_check
      _
    $region43: #{tpu_custom_call.1} parent=1 // pred_check_branch
      %350 = sbr.rel (0) target = $region45
    $region44: #{tpu_custom_call.1} parent=1 // pred_region
      %352 = vsyncadd [#allocation9], 0
      %s354 = sshll.u32 [#allocation8], 4
      %s355 = int_to_ptr.vmem [resolvable:$true] %s354
      %s356 = sshll.u32 %s7, 4
      %s357 = int_to_ptr.hbm [resolvable:$true] %s356
      %359 = dma.vmem_to_hbm [thread:$0]  %s355, 16, %s357, [#allocation9]
    $region45: #{tpu_custom_call.1} parent=1 // pred_fallthru
      _
    // Predicated region
    $region46: #{tpu_custom_call.1} parent=1 // pred_check
      _
    $region47: #{tpu_custom_call.1} parent=1 // pred_check_branch
      %361 = sbr.rel (0) target = $region49
    $region48: #{tpu_custom_call.1} parent=1 // pred_region
      %363 = dma.done [#allocation4], 32
    $region49: #{tpu_custom_call.1} parent=1 // pred_fallthru
      _
    // Predicated region
    $region50: #{tpu_custom_call.1} parent=1 // pred_check
      _
    $region51: #{tpu_custom_call.1} parent=1 // pred_check_branch
      %365 = sbr.rel (0) target = $region53
    $region52: #{tpu_custom_call.1} parent=1 // pred_region
      %367 = dma.done [#allocation9], 16
    $region53: #{tpu_custom_call.1} parent=1 // pred_fallthru
      _
    %368 = vsyncpa [#allocation3], 1
    %369 = vsyncpa [#allocation6], 1
    %370 = vsyncpa [#allocation4], 1
    %371 = vsyncpa [#allocation9], 1

</llo_original>
